<compile_context>
chip_gen: v5e
topology: v5e:2x2
jax: 0.10.0
libtpu: 0.0.40
codegen_flags: <defaults>
</compile_context>

<pallas_src>
import functools
import math

import jax
import jax.numpy as jnp
from jax import lax
from jax.experimental import pallas as pl
from jax.experimental.pallas import tpu as pltpu


def _self_attention_kernel(x_ref, w_ref, aux_ref, o_ref, *, c_qk, c_in, block_b):
    # x_ref:   (block_b, C, N)
    # w_ref:   (Ctot, C)   with Ctot = 2*Cqk + C, rows = [Wq ; Wk ; Wv]
    # aux_ref: (Ctot, 2)   col 0 = [bq ; bk ; bv], col 1 rows[0:C] = gamma
    w = w_ref[...]                              # (Ctot, C), VMEM-resident
    bias = aux_ref[:, 0:1]                      # (Ctot, 1)
    gamma = aux_ref[0:c_in, 1:2]                # (C, 1)

    for ib in range(block_b):                   # static, unrolled
        x = x_ref[ib]                           # (C, N)

        # Fused 1x1-conv projections: one MXU matmul for q, k and v.
        qkv = jnp.dot(w, x, preferred_element_type=jnp.float32) + bias   # (Ctot, N)
        q = qkv[0:c_qk].astype(jnp.bfloat16)            # (Cqk, N)
        k = qkv[c_qk:2 * c_qk].astype(jnp.bfloat16)     # (Cqk, N)
        v = qkv[2 * c_qk:].astype(jnp.bfloat16)         # (C,   N)

        # Logits directly in (key, query) order: s_t[j, i] = sum_c k[c,j] q[c,i].
        # Only the tiny (Cqk, N) operand gets relaid out; the (N, N) matrix is
        # never transposed.
        s_t = lax.dot_general(k, q, (((0,), (0,)), ((), ())),
                              preferred_element_type=jnp.float32)         # (Nk, Nq)

        # Numerically-stable softmax over the key axis (axis 0), normalization
        # deferred past the value matmul.
        m = jnp.max(s_t, axis=0, keepdims=True)                           # (1, Nq)
        e = jnp.exp(s_t - m)                                              # (Nk, Nq)
        denom = jnp.sum(e, axis=0, keepdims=True)                         # (1, Nq)

        # out_unnorm[c, i] = sum_j v[c, j] * e[j, i]   (canonical MXU matmul)
        out_un = lax.dot_general(v, e.astype(jnp.bfloat16),
                                 (((1,), (0,)), ((), ())),
                                 preferred_element_type=jnp.float32)      # (C, Nq)

        inv = pl.reciprocal(denom, approx=True)                           # EUP slot
        o_ref[ib] = gamma * (out_un * inv) + x


def self_attention(x, params, *, block_b=1):
    """x: (B, C, H, W) float32. Returns (B, C, H, W) float32."""
    B, C, H, W = x.shape
    N = H * W
    Cqk = params["w_q"].shape[0]
    Ctot = 2 * Cqk + C
    assert B % block_b == 0, "block_b must divide the batch size"

    xf = x.reshape(B, C, N)
    # Host-side packing: one fused weight ref, one tiny aux ref (bias | gamma).
    w_fused = jnp.concatenate([params["w_q"], params["w_k"], params["w_v"]], axis=0)  # (Ctot, C)
    b_fused = jnp.concatenate([params["b_q"], params["b_k"], params["b_v"]], axis=0)  # (Ctot,)
    gamma_pad = jnp.zeros((Ctot,), jnp.float32).at[:C].set(params["gamma"])
    aux = jnp.stack([b_fused, gamma_pad], axis=1)                                      # (Ctot, 2)

    kernel = functools.partial(_self_attention_kernel,
                               c_qk=Cqk, c_in=C, block_b=block_b)

    out = pl.pallas_call(
        kernel,
        out_shape=jax.ShapeDtypeStruct((B, C, N), jnp.float32),
        grid=(B // block_b,),
        in_specs=[
            pl.BlockSpec((block_b, C, N), lambda b: (b, 0, 0)),  # x, per-step batch tile
            pl.BlockSpec((Ctot, C), lambda b: (0, 0)),           # fused [Wq;Wk;Wv] (resident)
            pl.BlockSpec((Ctot, 2), lambda b: (0, 0)),           # [bias | gamma]   (resident)
        ],
        out_specs=pl.BlockSpec((block_b, C, N), lambda b: (b, 0, 0)),
        compiler_params=pltpu.CompilerParams(
            dimension_semantics=("parallel",)),
    )(xf, w_fused, aux)
    return out.reshape(B, C, H, W)


def self_attention_ref(x, params):
    """Pure-JAX reference mirroring the PyTorch forward."""
    B, C, H, W = x.shape
    N = H * W
    hp = lax.Precision.HIGHEST
    xf = x.reshape(B, C, N)
    q = jnp.einsum("oc,bcn->bon", params["w_q"], xf, precision=hp) + params["b_q"][None, :, None]
    k = jnp.einsum("oc,bcn->bon", params["w_k"], xf, precision=hp) + params["b_k"][None, :, None]
    v = jnp.einsum("oc,bcn->bon", params["w_v"], xf, precision=hp) + params["b_v"][None, :, None]
    attn = jax.nn.softmax(jnp.einsum("bci,bcj->bij", q, k, precision=hp), axis=-1)
    out = jnp.einsum("bcj,bij->bci", v, attn, precision=hp)
    return (params["gamma"][None, :, None] * out + xf).reshape(B, C, H, W)


def init_params(key, ni):
    """Conv2d(k=1) weights stored as (C_out, C_in); PyTorch-style uniform init."""
    cq = ni // 8
    k1, k2, k3, k4, k5, k6, k7 = jax.random.split(key, 7)
    bound = 1.0 / math.sqrt(ni)
    return {
        "w_q": jax.random.uniform(k1, (cq, ni), jnp.float32, -bound, bound),
        "b_q": jax.random.uniform(k2, (cq,), jnp.float32, -bound, bound),
        "w_k": jax.random.uniform(k3, (cq, ni), jnp.float32, -bound, bound),
        "b_k": jax.random.uniform(k4, (cq,), jnp.float32, -bound, bound),
        "w_v": jax.random.uniform(k5, (ni, ni), jnp.float32, -bound, bound),
        "b_v": jax.random.uniform(k6, (ni,), jnp.float32, -bound, bound),
        # Module inits gamma to zeros; use nonzero values here so the attention
        # path is actually exercised by the numerical check.
        "gamma": jax.random.uniform(k7, (ni,), jnp.float32, -1.0, 1.0),
    }


if __name__ == "__main__":
    key = jax.random.PRNGKey(0)
    B, C, H, W = 2, 32, 16, 16          # ni=32 -> ni//8 = 4; N = 256
    kx, kp = jax.random.split(key)
    x = jax.random.normal(kx, (B, C, H, W), jnp.float32)
    params = init_params(kp, C)

    out = jax.jit(self_attention)(x, params)
    out = jax.block_until_ready(out)

    ref = self_attention_ref(x, params)

    assert out.shape == (B, C, H, W) and out.dtype == jnp.float32
    assert jnp.allclose(out, ref, atol=2e-2, rtol=2e-2), (
        f"max abs err = {jnp.max(jnp.abs(out - ref))}")
    print("KERNEL_OK")
</pallas_src>

<mosaic_0001>
module attributes {stable_mosaic.version = 11 : i64} {
  func.func @_self_attention_kernel(%arg0: i32, %arg1: memref<1x32x256xf32, #tpu.memory_space<vmem>>, %arg2: memref<40x32xf32, #tpu.memory_space<vmem>>, %arg3: memref<40x2xf32, #tpu.memory_space<vmem>>, %arg4: memref<1x32x256xf32, #tpu.memory_space<vmem>>) attributes {dimension_semantics = [#tpu.dimension_semantics<parallel>], iteration_bounds = array<i64: 2>, scalar_prefetch = 0 : i64, scratch_operands = 0 : i64, tpu.core_type = #tpu.core_type<tc>, window_params = [{transform_indices = @transform_0, window_bounds = array<i64: 1, 32, 256>}, {pipeline_mode = #tpu.pipeline_mode<synchronous>, transform_indices = @transform_1, window_bounds = array<i64: 40, 32>}, {pipeline_mode = #tpu.pipeline_mode<synchronous>, transform_indices = @transform_2, window_bounds = array<i64: 40, 2>}, {transform_indices = @transform_3, window_bounds = array<i64: 1, 32, 256>}]} {
    %c0 = arith.constant 0 : index
    %c0_0 = arith.constant 0 : index
    %0 = vector.load %arg2[%c0, %c0_0] : memref<40x32xf32, #tpu.memory_space<vmem>>, vector<40x32xf32>
    %c0_1 = arith.constant 0 : index
    %c0_2 = arith.constant 0 : index
    %1 = vector.load %arg3[%c0_1, %c0_2] : memref<40x2xf32, #tpu.memory_space<vmem>>, vector<40x1xf32>
    %c0_3 = arith.constant 0 : index
    %c1 = arith.constant 1 : index
    %2 = vector.load %arg3[%c0_3, %c1] : memref<40x2xf32, #tpu.memory_space<vmem>>, vector<32x1xf32>
    %c0_4 = arith.constant 0 : index
    %c0_5 = arith.constant 0 : index
    %c0_6 = arith.constant 0 : index
    %3 = vector.load %arg1[%c0_4, %c0_5, %c0_6] : memref<1x32x256xf32, #tpu.memory_space<vmem>>, vector<1x32x256xf32>
    %4 = vector.shape_cast %3 : vector<1x32x256xf32> to vector<32x256xf32>
    %cst = arith.constant dense<0.000000e+00> : vector<40x256xf32>
    %5 = tpu.matmul %0, %4, %cst {dimension_numbers = #tpu.dot_dimension_numbers<[1], [0], [0], [1], [0, 0, 1, 1], [], []>} : vector<40x32xf32>, vector<32x256xf32>, vector<40x256xf32> -> vector<40x256xf32>
    %6 = vector.broadcast %1 : vector<40x1xf32> to vector<40x256xf32>
    %7 = arith.addf %5, %6 : vector<40x256xf32>
    %8 = vector.extract_strided_slice %7 {offsets = [0, 0], sizes = [4, 256], strides = [1, 1]} : vector<40x256xf32> to vector<4x256xf32>
    %9 = arith.truncf %8 : vector<4x256xf32> to vector<4x256xbf16>
    %10 = vector.extract_strided_slice %7 {offsets = [4, 0], sizes = [4, 256], strides = [1, 1]} : vector<40x256xf32> to vector<4x256xf32>
    %11 = arith.truncf %10 : vector<4x256xf32> to vector<4x256xbf16>
    %12 = vector.extract_strided_slice %7 {offsets = [8, 0], sizes = [32, 256], strides = [1, 1]} : vector<40x256xf32> to vector<32x256xf32>
    %13 = arith.truncf %12 : vector<32x256xf32> to vector<32x256xbf16>
    %cst_7 = arith.constant dense<0.000000e+00> : vector<256x256xf32>
    %14 = tpu.matmul %11, %9, %cst_7 {dimension_numbers = #tpu.dot_dimension_numbers<[0], [0], [1], [1], [0, 1, 1, 1], [], []>} : vector<4x256xbf16>, vector<4x256xbf16>, vector<256x256xf32> -> vector<256x256xf32>
    %cst_8 = arith.constant dense<0xFF800000> : vector<256xf32>
    %15 = vector.multi_reduction <maximumf>, %14, %cst_8 [0] : vector<256x256xf32> to vector<256xf32>
    %16 = vector.shape_cast %15 : vector<256xf32> to vector<1x256xf32>
    %17 = vector.broadcast %16 : vector<1x256xf32> to vector<256x256xf32>
    %18 = arith.subf %14, %17 : vector<256x256xf32>
    %19 = math.exp %18 : vector<256x256xf32>
    %cst_9 = arith.constant dense<0.000000e+00> : vector<256xf32>
    %20 = vector.multi_reduction <add>, %19, %cst_9 [0] : vector<256x256xf32> to vector<256xf32>
    %21 = vector.shape_cast %20 : vector<256xf32> to vector<1x256xf32>
    %22 = arith.truncf %19 : vector<256x256xf32> to vector<256x256xbf16>
    %cst_10 = arith.constant dense<0.000000e+00> : vector<32x256xf32>
    %23 = tpu.matmul %13, %22, %cst_10 {dimension_numbers = #tpu.dot_dimension_numbers<[1], [0], [0], [1], [0, 0, 1, 1], [], []>} : vector<32x256xbf16>, vector<256x256xbf16>, vector<32x256xf32> -> vector<32x256xf32>
    %24 = tpu.reciprocal %21 {approx = true} : vector<1x256xf32> -> vector<1x256xf32>
    %25 = vector.broadcast %24 : vector<1x256xf32> to vector<32x256xf32>
    %26 = arith.mulf %23, %25 : vector<32x256xf32>
    %27 = vector.broadcast %2 : vector<32x1xf32> to vector<32x256xf32>
    %28 = arith.mulf %27, %26 : vector<32x256xf32>
    %29 = arith.addf %28, %4 : vector<32x256xf32>
    %c0_11 = arith.constant 0 : index
    %c0_12 = arith.constant 0 : index
    %c0_13 = arith.constant 0 : index
    %30 = vector.load %arg4[%c0_11, %c0_12, %c0_13] : memref<1x32x256xf32, #tpu.memory_space<vmem>>, vector<1x32x256xf32>
    %31 = vector.shape_cast %30 : vector<1x32x256xf32> to vector<32x256xf32>
    %32 = vector.shape_cast %29 : vector<32x256xf32> to vector<1x32x256xf32>
    tpu.vector_store %arg4[%c0_11, %c0_12, %c0_13], %32 {strides = array<i32>} : memref<1x32x256xf32, #tpu.memory_space<vmem>>, vector<1x32x256xf32>,
    return
  }
  func.func @transform_0(%arg0: i32) -> (i32, i32, i32) {
    %c0_i32 = arith.constant 0 : i32
    %c0_i32_0 = arith.constant 0 : i32
    %c0_i32_1 = arith.constant 0 : i32
    return %arg0, %c0_i32, %c0_i32_0 : i32, i32, i32
  }
  func.func @transform_1(%arg0: i32) -> (i32, i32) {
    %c0_i32 = arith.constant 0 : i32
    %c0_i32_0 = arith.constant 0 : i32
    %c0_i32_1 = arith.constant 0 : i32
    return %c0_i32, %c0_i32_0 : i32, i32
  }
  func.func @transform_2(%arg0: i32) -> (i32, i32) {
    %c0_i32 = arith.constant 0 : i32
    %c0_i32_0 = arith.constant 0 : i32
    %c0_i32_1 = arith.constant 0 : i32
    return %c0_i32, %c0_i32_0 : i32, i32
  }
  func.func @transform_3(%arg0: i32) -> (i32, i32, i32) {
    %c0_i32 = arith.constant 0 : i32
    %c0_i32_0 = arith.constant 0 : i32
    %c0_i32_1 = arith.constant 0 : i32
    return %arg0, %c0_i32, %c0_i32_0 : i32, i32, i32
  }
}

</mosaic_0001>

<llo_original>
// kernel: self_attention.1
$region0: #{self_attention.1}
  #allocation0 [shape = 'u32[]', space=smem, size = 0x4, offset = 0x4, fixed_abs, tag = 'smem constant byte address 0x4 - core index']
  #allocation1 [shape = 'u32[72,128]{1,0:T(1,128)}', space=vmem, size = 0x9000, scoped, tag = 'internal scratch']
  %s0 = inlined_call_operand.vmem [shape: f32[2,32,256], index: 0, kind: input, shape index: {}]
  %s1 = inlined_call_operand.vmem [shape: f32[40,32], index: 1, kind: input, shape index: {}]
  %s2 = inlined_call_operand.vmem [shape: f32[40,2], index: 2, kind: input, shape index: {}]
  %s3 = inlined_call_operand.vmem [shape: f32[2,32,256], index: 3, kind: output, shape index: {}]
  %s4 = sld [smem:[#allocation0]]
  $region45: #{self_attention.1} parent=0
    _
  %s6 = ssub.s32 1, %s4
  %s7 = scalar_select 0, %s6, %s4
  loop: start=0, step=1, limit=4
  $region2: #{self_attention.1} parent=0 // loop_pre_header
    _
  $region3: #{self_attention.1} parent=0 // loop_header
    %s9 = sphi 0, %s13
    %p10 = scmp.ge.s32.totalorder %s9, 4
    %s19 = sphi 0, %s21
    %s22 = sphi 0, %s19
    %s23 = sphi 0, %s22
    %s39 = sphi 0, %s23
    %s43 = sphi 0, %s43
    %s45 = sphi 0, %s43
    %s46 = sphi 0, %s45
    %s60 = sphi 0, %s46
    %s64 = sphi 0, %s64
    %s66 = sphi 0, %s64
    %s67 = sphi 0, %s66
    %s81 = sphi 0, %s67
    %s87 = sphi 0, %s89
    %s90 = sphi 0, %s87
    %s91 = sphi 0, %s90
    %s107 = sphi 0, %s91
  $region4: #{self_attention.1} parent=0 // loop_header_branch
    %12 = sbr.rel (%p10) target = $region8
  $region5: #{self_attention.1} parent=0 // loop_body
    %s14 = ssub.s32 %s9, 1
    %s15 = ssub.s32 %s9, 2
    %s16 = sadd.s32 %s9, 1
    %s17 = ssub.s32 %s9, %s16
    %p18 = scmp.eq.s32.totalorder %s17, 0
    %s20 = sadd.s32 %s19, 1
    %s21 = scalar_select %p18, %s19, %s20
    %p24 = pneg %p18
    %p25 = scmp.eq.s32.totalorder %s9, 1
    %p26 = por %p24, %p25
    %p27 = scmp.ne.s32.totalorder %s19, %s22
    %p28 = scmp.eq.s32.totalorder %s9, 0
    %p29 = por %p27, %p28
    %p30 = scmp.ne.s32.totalorder %s19, %s22
    %p31 = scmp.eq.s32.totalorder %s14, 1
    %p32 = por %p30, %p31
    %p33 = scmp.ne.s32.totalorder %s22, %s23
    %p34 = scmp.eq.s32.totalorder %s14, 0
    %p35 = por %p33, %p34
    %p36 = scmp.ne.s32.totalorder %s22, %s23
    %p37 = scmp.eq.s32.totalorder %s15, 1
    %p38 = por %p36, %p37
    %p40 = scmp.ne.s32.totalorder %s23, %s39
    %p41 = scmp.eq.s32.totalorder %s15, 0
    %p42 = por %p40, %p41
    %s44 = sadd.s32 %s43, 1
    %p47 = scmp.eq.s32.totalorder %s9, 1
    %p48 = scmp.ne.s32.totalorder %s43, %s45
    %p49 = scmp.eq.s32.totalorder %s9, 0
    %p50 = por %p48, %p49
    %p51 = scmp.ne.s32.totalorder %s43, %s45
    %p52 = scmp.eq.s32.totalorder %s14, 1
    %p53 = por %p51, %p52
    %p54 = scmp.ne.s32.totalorder %s45, %s46
    %p55 = scmp.eq.s32.totalorder %s14, 0
    %p56 = por %p54, %p55
    %p57 = scmp.ne.s32.totalorder %s45, %s46
    %p58 = scmp.eq.s32.totalorder %s15, 1
    %p59 = por %p57, %p58
    %p61 = scmp.ne.s32.totalorder %s46, %s60
    %p62 = scmp.eq.s32.totalorder %s15, 0
    %p63 = por %p61, %p62
    %s65 = sadd.s32 %s64, 1
    %p68 = scmp.eq.s32.totalorder %s9, 1
    %p69 = scmp.ne.s32.totalorder %s64, %s66
    %p70 = scmp.eq.s32.totalorder %s9, 0
    %p71 = por %p69, %p70
    %p72 = scmp.ne.s32.totalorder %s64, %s66
    %p73 = scmp.eq.s32.totalorder %s14, 1
    %p74 = por %p72, %p73
    %p75 = scmp.ne.s32.totalorder %s66, %s67
    %p76 = scmp.eq.s32.totalorder %s14, 0
    %p77 = por %p75, %p76
    %p78 = scmp.ne.s32.totalorder %s66, %s67
    %p79 = scmp.eq.s32.totalorder %s15, 1
    %p80 = por %p78, %p79
    %p82 = scmp.ne.s32.totalorder %s67, %s81
    %p83 = scmp.eq.s32.totalorder %s15, 0
    %p84 = por %p82, %p83
    %s85 = ssub.s32 %s9, %s16
    %p86 = scmp.eq.s32.totalorder %s85, 0
    %s88 = sadd.s32 %s87, 1
    %s89 = scalar_select %p86, %s87, %s88
    %p92 = pneg %p86
    %p93 = scmp.eq.s32.totalorder %s9, 1
    %p94 = por %p92, %p93
    %p95 = scmp.ne.s32.totalorder %s87, %s90
    %p96 = scmp.eq.s32.totalorder %s9, 0
    %p97 = por %p95, %p96
    %p98 = scmp.ne.s32.totalorder %s87, %s90
    %p99 = scmp.eq.s32.totalorder %s14, 1
    %p100 = por %p98, %p99
    %p101 = scmp.ne.s32.totalorder %s90, %s91
    %p102 = scmp.eq.s32.totalorder %s14, 0
    %p103 = por %p101, %p102
    %p104 = scmp.ne.s32.totalorder %s90, %s91
    %p105 = scmp.eq.s32.totalorder %s15, 1
    %p106 = por %p104, %p105
    %p108 = scmp.ne.s32.totalorder %s91, %s107
    %p109 = scmp.eq.s32.totalorder %s15, 0
    %p110 = por %p108, %p109
    %p111 = scmp.le.s32.totalorder 1, %s9
    %p112 = scmp.lt.s32.totalorder %s9, 3
    %p113 = pnand %p111, %p112
    %p114 = pneg %p113
    // Predicated region
    $region9: #{self_attention.1} parent=5 // pred_check
      _
    $region10: #{self_attention.1} parent=5 // pred_check_branch
      %116 = sbr.rel (%p113) target = $region12
    $region11: #{self_attention.1} parent=5 // pred_region
      %s117 = ssub.s32 %s9, 1
      // Predicated region
      $region13: #{self_attention.1} parent=11 // pred_check
        %p118 = pneg %p56
      $region14: #{self_attention.1} parent=11 // pred_check_branch
        %120 = sbr.rel (%p118) target = $region16
      $region15: #{self_attention.1} parent=11 // pred_region
        _
      $region16: #{self_attention.1} parent=11 // pred_fallthru
        _
      // Predicated region
      $region17: #{self_attention.1} parent=11 // pred_check
        %p121 = pneg %p77
      $region18: #{self_attention.1} parent=11 // pred_check_branch
        %123 = sbr.rel (%p121) target = $region20
      $region19: #{self_attention.1} parent=11 // pred_region
        _
      $region20: #{self_attention.1} parent=11 // pred_fallthru
        _
    $region12: #{self_attention.1} parent=5 // pred_fallthru
      _
    %p124 = scmp.lt.s32.totalorder %s9, 2
    // Predicated region
    $region21: #{self_attention.1} parent=5 // pred_check
      %p125 = pneg %p124
    $region22: #{self_attention.1} parent=5 // pred_check_branch
      %127 = sbr.rel (%p125) target = $region24
    $region23: #{self_attention.1} parent=5 // pred_region
      // Predicated region
      $region25: #{self_attention.1} parent=23 // pred_check
        %p128 = pneg %p29
      $region26: #{self_attention.1} parent=23 // pred_check_branch
        %130 = sbr.rel (%p128) target = $region28
      $region27: #{self_attention.1} parent=23 // pred_region
        %p131 = scmp.lt.s32.totalorder %s9, 1
        %s132 = scalar_select %p131, %s9, 1
        %s133 = smul.addr %s132, 8
        %s134 = smul.addr %s133, 8
        %s135 = scalar_lea.vmem %s0, %s134
      $region28: #{self_attention.1} parent=23 // pred_fallthru
        _
    $region24: #{self_attention.1} parent=5 // pred_fallthru
      _
    %p136 = scmp.le.s32.totalorder 1, %s9
    %p137 = scmp.lt.s32.totalorder %s9, 3
    %p138 = pnand %p136, %p137
    %p139 = pneg %p138
    // Predicated region
    $region29: #{self_attention.1} parent=5 // pred_check
      _
    $region30: #{self_attention.1} parent=5 // pred_check_branch
      %141 = sbr.rel (%p138) target = $region32
    $region31: #{self_attention.1} parent=5 // pred_region
      %s142 = ssub.s32 %s9, 1
      %p143 = scmp.lt.s32.totalorder %s14, 1
      %s144 = scalar_select %p143, %s14, 1
      %s145 = smul.addr %s144, 8
      %s146 = smul.addr %s145, 8
      %s147 = scalar_lea.vmem %s0, %s146
      %p148 = pneg %p35
      %p149 = pneg %p32
      %p150 = pneg %p56
      %p151 = pneg %p53
      %p152 = pneg %p77
      %p153 = pneg %p74
      %p154 = pneg %p103
      %p155 = pneg %p100
      %p156 = scmp.lt.s32.totalorder %s14, 1
      %s157 = scalar_select %p156, %s14, 1
      %s158 = smul.addr %s157, 8
      %s159 = smul.addr %s158, 8
      %s160 = scalar_lea.vmem %s3, %s159
      %p161 = scmp.lt.s32.totalorder %s14, 1
      %s162 = scalar_select %p161, %s14, 1
      %s163 = smul.addr %s162, 8
      %s164 = smul.addr %s163, 8
      %s165 = scalar_lea.vmem %s0, %s164
      %p166 = scmp.lt.s32.totalorder %s14, 1
      %s167 = scalar_select %p166, %s14, 1
      %s168 = smul.addr %s167, 8
      %s169 = smul.addr %s168, 8
      %s170 = scalar_lea.vmem %s3, %s169
      %v172 = vld [vmem:[%s1] sm:$0xff]
      %v173 = vld [vmem:[%s1 + $0x8] sm:$0xff]
      %v174 = vld [vmem:[%s1 + $0x10] sm:$0xff]
      %v175 = vld [vmem:[%s1 + $0x18] sm:$0xff]
      %v176 = vld [vmem:[%s1 + $0x20] sm:$0xff]
      %v177 = vld [vmem:[%s2] sm:$0xff]
      %v178 = vld [vmem:[%s2 + $0x8] sm:$0xff]
      %v179 = vld [vmem:[%s2 + $0x10] sm:$0xff]
      %v180 = vld [vmem:[%s2 + $0x18] sm:$0xff]
      %v181 = vld [vmem:[%s2 + $0x20] sm:$0xff]
      %v182 = vld [vmem:[%s165] sm:$0xff]
      %v183 = vld [vmem:[%s165 + $0x8] sm:$0xff]
      %v184 = vld [vmem:[%s165 + $0x10] sm:$0xff]
      %v185 = vld [vmem:[%s165 + $0x18] sm:$0xff]
      %v186 = vld [vmem:[%s165 + $0x20] sm:$0xff]
      %v187 = vld [vmem:[%s165 + $0x28] sm:$0xff]
      %v188 = vld [vmem:[%s165 + $0x30] sm:$0xff]
      %v189 = vld [vmem:[%s165 + $0x38] sm:$0xff]
      %191 = vset.pattern.permute.xlu0 0
      %192 = vperm.xlu0 %191, %v177
      %v193 = vpop.permute.xlu0 %192
      %196 = vset.pattern.permute.xlu0 0
      %197 = vperm.xlu0 %196, %v178
      %v198 = vpop.permute.xlu0 %197
      %201 = vset.pattern.permute.xlu0 0
      %202 = vperm.xlu0 %201, %v179
      %v203 = vpop.permute.xlu0 %202
      %206 = vset.pattern.permute.xlu0 0
      %207 = vperm.xlu0 %206, %v180
      %v208 = vpop.permute.xlu0 %207
      %211 = vset.pattern.permute.xlu0 0
      %212 = vperm.xlu0 %211, %v181
      %v213 = vpop.permute.xlu0 %212
      %vm215 = vcmask 261120
      %v217 = vsel %vm215, %v172, 0
      %v220 = vsel %vm215, %v173, 0
      %v223 = vsel %vm215, %v174, 0
      %v226 = vsel %vm215, %v175, 0
      %v229 = vsel %vm215, %v176, 0
      %231 = vmatpush.msra.mxu0 0.0
      %232 = vmatpush.msra.mxu0 0.0
      %233 = vmatpush.msra.mxu0 0.0
      %234 = vmatpush.msra.mxu0 0.0
      %235 = vmatpush.msra.mxu0 0.0
      %236 = vmatpush.msra.mxu0 0.0
      %237 = vmatpush.msra.mxu0 0.0
      %238 = vmatpush.msra.mxu0 0.0
      %239 = vmatpush.msra.mxu0 0.0
      %240 = vmatpush.msra.mxu0 0.0
      %241 = vmatpush.msra.mxu0 0.0
      %242 = vmatpush.msra.mxu0 0.0
      %243 = vmatpush.msra.mxu0 %v188
      %244 = vmatpush.msra.mxu0 %v186
      %245 = vmatpush.msra.mxu0 %v184
      %246 = vmatpush.msra.mxu0 %v182
      %247 = vmatmul.f32.gmra.mxu0 %v217
      %v248 = vpop.f32.mrf.mxu0
      %v249 = vadd.f32 %v193, %v248
      %250 = vmatmul.f32.gmra.mxu0 %v220
      %v251 = vpop.f32.mrf.mxu0
      %v252 = vadd.f32 %v198, %v251
      %253 = vmatmul.f32.gmra.mxu0 %v223
      %v254 = vpop.f32.mrf.mxu0
      %v255 = vadd.f32 %v203, %v254
      %256 = vmatmul.f32.gmra.mxu0 %v226
      %v257 = vpop.f32.mrf.mxu0
      %v258 = vadd.f32 %v208, %v257
      %259 = vmatmul.f32.gmra.mxu0 %v229
      %v260 = vpop.f32.mrf.mxu0
      %v261 = vadd.f32 %v213, %v260
      %262 = vdwg.mxu0
      %263 = vmatpush.msra.mxu0 0.0
      %264 = vmatpush.msra.mxu0 0.0
      %265 = vmatpush.msra.mxu0 0.0
      %266 = vmatpush.msra.mxu0 0.0
      %267 = vmatpush.msra.mxu0 0.0
      %268 = vmatpush.msra.mxu0 0.0
      %269 = vmatpush.msra.mxu0 0.0
      %270 = vmatpush.msra.mxu0 0.0
      %271 = vmatpush.msra.mxu0 0.0
      %272 = vmatpush.msra.mxu0 0.0
      %273 = vmatpush.msra.mxu0 0.0
      %274 = vmatpush.msra.mxu0 0.0
      %275 = vmatpush.msra.mxu0 %v189
      %276 = vmatpush.msra.mxu0 %v187
      %277 = vmatpush.msra.mxu0 %v185
      %278 = vmatpush.msra.mxu0 %v183
      %279 = vmatmul.f32.gmra.mxu0 %v217
      %v280 = vpop.f32.mrf.mxu0
      %v281 = vadd.f32 %v193, %v280
      %282 = vmatmul.f32.gmra.mxu0 %v220
      %v283 = vpop.f32.mrf.mxu0
      %v284 = vadd.f32 %v198, %v283
      %285 = vmatmul.f32.gmra.mxu0 %v223
      %v286 = vpop.f32.mrf.mxu0
      %v287 = vadd.f32 %v203, %v286
      %288 = vmatmul.f32.gmra.mxu0 %v226
      %v289 = vpop.f32.mrf.mxu0
      %v290 = vadd.f32 %v208, %v289
      %291 = vmatmul.f32.gmra.mxu0 %v229
      %v292 = vpop.f32.mrf.mxu0
      %v293 = vadd.f32 %v213, %v292
      %294 = vdwg.mxu0
      %v295 = vpack.c.bf16 %v249, %v249
      %v296 = vpack.c.bf16 %v281, %v281
      %v297 = vpack.c.bf16 %v255, %v252
      %v298 = vpack.c.bf16 %v287, %v284
      %v299 = vpack.c.bf16 %v261, %v258
      %v300 = vpack.c.bf16 %v293, %v290
      %v303 = vrot.slane %v295, 2
      %v304 = vrot.slane %v296, 2
      %307 = vxpose.binary.xlu0.c.b16.start [1/16] %v304, %v303, 128
      %308 = vxpose.binary.xlu0.c.b16.cont [2/16] 0, 0, 128
      %309 = vxpose.binary.xlu0.c.b16.cont [3/16] 0, 0, 128
      %310 = vxpose.binary.xlu0.c.b16.cont [4/16] 0, 0, 128
      %311 = vxpose.binary.xlu0.c.b16.cont [5/16] 0, 0, 128
      %312 = vxpose.binary.xlu0.c.b16.cont [6/16] 0, 0, 128
      %313 = vxpose.binary.xlu0.c.b16.cont [7/16] 0, 0, 128
      %314 = vxpose.binary.xlu0.c.b16.end [8/16] 0, 0, 128
      %v315 = vpop.trf.xlu0
      %v316 = vpop.trf.xlu0
      %v317 = vpop.trf.xlu0
      %v318 = vpop.trf.xlu0
      %v319 = vpop.trf.xlu0
      %v320 = vpop.trf.xlu0
      %v321 = vpop.trf.xlu0
      %v322 = vpop.trf.xlu0
      %v323 = vpop.trf.xlu0
      %v324 = vpop.trf.xlu0
      %v325 = vpop.trf.xlu0
      %v326 = vpop.trf.xlu0
      %v327 = vpop.trf.xlu0
      %v328 = vpop.trf.xlu0
      %v329 = vpop.trf.xlu0
      %v330 = vpop.trf.xlu0
      %vm331 = vcmask 31744
      %v333 = vsel %vm331, %v315, 0
      %v336 = vsel %vm331, %v317, 0
      %v339 = vsel %vm331, %v319, 0
      %v342 = vsel %vm331, %v321, 0
      %v345 = vsel %vm331, %v323, 0
      %v348 = vsel %vm331, %v325, 0
      %v351 = vsel %vm331, %v327, 0
      %v354 = vsel %vm331, %v329, 0
      %v357 = vsel %vm331, %v316, 0
      %v360 = vsel %vm331, %v318, 0
      %v363 = vsel %vm331, %v320, 0
      %v366 = vsel %vm331, %v322, 0
      %v369 = vsel %vm331, %v324, 0
      %v372 = vsel %vm331, %v326, 0
      %v375 = vsel %vm331, %v328, 0
      %v378 = vsel %vm331, %v330, 0
      %vm380 = vcmask 1041408
      %v382 = vsel %vm380, %v295, 0
      %v385 = vsel %vm380, %v296, 0
      %387 = vmatpush.bf16.msra.mxu0 0
      %388 = vmatpush.bf16.msra.mxu0 0
      %389 = vmatpush.bf16.msra.mxu0 0
      %390 = vmatpush.bf16.msra.mxu0 0
      %391 = vmatpush.bf16.msra.mxu0 0
      %392 = vmatpush.bf16.msra.mxu0 0
      %393 = vmatpush.bf16.msra.mxu0 0
      %394 = vmatpush.bf16.msra.mxu0 %v382
      %395 = vmatmul.bf16.gmra.mxu0 %v333
      %v396 = vpop.f32.mrf.mxu0
      %v397 = vadd.f32 0.0, %v396
      %v398 = vpop.f32.mrf.mxu0
      %v399 = vadd.f32 0.0, %v398
      %400 = vmatmul.bf16.gmra.mxu0 %v336
      %v401 = vpop.f32.mrf.mxu0
      %v402 = vadd.f32 0.0, %v401
      %v403 = vpop.f32.mrf.mxu0
      %v404 = vadd.f32 0.0, %v403
      %405 = vmatmul.bf16.gmra.mxu0 %v339
      %v406 = vpop.f32.mrf.mxu0
      %v407 = vadd.f32 0.0, %v406
      %v408 = vpop.f32.mrf.mxu0
      %v409 = vadd.f32 0.0, %v408
      %410 = vmatmul.bf16.gmra.mxu0 %v342
      %v411 = vpop.f32.mrf.mxu0
      %v412 = vadd.f32 0.0, %v411
      %v413 = vpop.f32.mrf.mxu0
      %v414 = vadd.f32 0.0, %v413
      %415 = vmatmul.bf16.gmra.mxu0 %v345
      %v416 = vpop.f32.mrf.mxu0
      %v417 = vadd.f32 0.0, %v416
      %v418 = vpop.f32.mrf.mxu0
      %v419 = vadd.f32 0.0, %v418
      %420 = vmatmul.bf16.gmra.mxu0 %v348
      %v421 = vpop.f32.mrf.mxu0
      %v422 = vadd.f32 0.0, %v421
      %v423 = vpop.f32.mrf.mxu0
      %v424 = vadd.f32 0.0, %v423
      %425 = vmatmul.bf16.gmra.mxu0 %v351
      %v426 = vpop.f32.mrf.mxu0
      %v427 = vadd.f32 0.0, %v426
      %v428 = vpop.f32.mrf.mxu0
      %v429 = vadd.f32 0.0, %v428
      %430 = vmatmul.bf16.gmra.mxu0 %v354
      %v431 = vpop.f32.mrf.mxu0
      %v432 = vadd.f32 0.0, %v431
      %v433 = vpop.f32.mrf.mxu0
      %v434 = vadd.f32 0.0, %v433
      %435 = vmatmul.bf16.gmra.mxu0 %v357
      %v436 = vpop.f32.mrf.mxu0
      %v437 = vadd.f32 0.0, %v436
      %v438 = vpop.f32.mrf.mxu0
      %v439 = vadd.f32 0.0, %v438
      %440 = vmatmul.bf16.gmra.mxu0 %v360
      %v441 = vpop.f32.mrf.mxu0
      %v442 = vadd.f32 0.0, %v441
      %v443 = vpop.f32.mrf.mxu0
      %v444 = vadd.f32 0.0, %v443
      %445 = vmatmul.bf16.gmra.mxu0 %v363
      %v446 = vpop.f32.mrf.mxu0
      %v447 = vadd.f32 0.0, %v446
      %v448 = vpop.f32.mrf.mxu0
      %v449 = vadd.f32 0.0, %v448
      %450 = vmatmul.bf16.gmra.mxu0 %v366
      %v451 = vpop.f32.mrf.mxu0
      %v452 = vadd.f32 0.0, %v451
      %v453 = vpop.f32.mrf.mxu0
      %v454 = vadd.f32 0.0, %v453
      %455 = vmatmul.bf16.gmra.mxu0 %v369
      %v456 = vpop.f32.mrf.mxu0
      %v457 = vadd.f32 0.0, %v456
      %v458 = vpop.f32.mrf.mxu0
      %v459 = vadd.f32 0.0, %v458
      %460 = vmatmul.bf16.gmra.mxu0 %v372
      %v461 = vpop.f32.mrf.mxu0
      %v462 = vadd.f32 0.0, %v461
      %v463 = vpop.f32.mrf.mxu0
      %v464 = vadd.f32 0.0, %v463
      %465 = vmatmul.bf16.gmra.mxu0 %v375
      %v466 = vpop.f32.mrf.mxu0
      %v467 = vadd.f32 0.0, %v466
      %v468 = vpop.f32.mrf.mxu0
      %v469 = vadd.f32 0.0, %v468
      %470 = vmatmul.bf16.gmra.mxu0 %v378
      %v471 = vpop.f32.mrf.mxu0
      %v472 = vadd.f32 0.0, %v471
      %v473 = vpop.f32.mrf.mxu0
      %v474 = vadd.f32 0.0, %v473
      %475 = vdwg.mxu0
      %476 = vmatpush.bf16.msra.mxu0 0
      %477 = vmatpush.bf16.msra.mxu0 0
      %478 = vmatpush.bf16.msra.mxu0 0
      %479 = vmatpush.bf16.msra.mxu0 0
      %480 = vmatpush.bf16.msra.mxu0 0
      %481 = vmatpush.bf16.msra.mxu0 0
      %482 = vmatpush.bf16.msra.mxu0 0
      %483 = vmatpush.bf16.msra.mxu0 %v385
      %484 = vmatmul.bf16.gmra.mxu0 %v333
      %v485 = vpop.f32.mrf.mxu0
      %v486 = vadd.f32 0.0, %v485
      %v487 = vpop.f32.mrf.mxu0
      %v488 = vadd.f32 0.0, %v487
      %489 = vmatmul.bf16.gmra.mxu0 %v336
      %v490 = vpop.f32.mrf.mxu0
      %v491 = vadd.f32 0.0, %v490
      %v492 = vpop.f32.mrf.mxu0
      %v493 = vadd.f32 0.0, %v492
      %494 = vmatmul.bf16.gmra.mxu0 %v339
      %v495 = vpop.f32.mrf.mxu0
      %v496 = vadd.f32 0.0, %v495
      %v497 = vpop.f32.mrf.mxu0
      %v498 = vadd.f32 0.0, %v497
      %499 = vmatmul.bf16.gmra.mxu0 %v342
      %v500 = vpop.f32.mrf.mxu0
      %v501 = vadd.f32 0.0, %v500
      %v502 = vpop.f32.mrf.mxu0
      %v503 = vadd.f32 0.0, %v502
      %504 = vmatmul.bf16.gmra.mxu0 %v345
      %v505 = vpop.f32.mrf.mxu0
      %v506 = vadd.f32 0.0, %v505
      %v507 = vpop.f32.mrf.mxu0
      %v508 = vadd.f32 0.0, %v507
      %509 = vmatmul.bf16.gmra.mxu0 %v348
      %v510 = vpop.f32.mrf.mxu0
      %v511 = vadd.f32 0.0, %v510
      %v512 = vpop.f32.mrf.mxu0
      %v513 = vadd.f32 0.0, %v512
      %514 = vmatmul.bf16.gmra.mxu0 %v351
      %v515 = vpop.f32.mrf.mxu0
      %v516 = vadd.f32 0.0, %v515
      %v517 = vpop.f32.mrf.mxu0
      %v518 = vadd.f32 0.0, %v517
      %519 = vmatmul.bf16.gmra.mxu0 %v354
      %v520 = vpop.f32.mrf.mxu0
      %v521 = vadd.f32 0.0, %v520
      %v522 = vpop.f32.mrf.mxu0
      %v523 = vadd.f32 0.0, %v522
      %524 = vmatmul.bf16.gmra.mxu0 %v357
      %v525 = vpop.f32.mrf.mxu0
      %v526 = vadd.f32 0.0, %v525
      %v527 = vpop.f32.mrf.mxu0
      %v528 = vadd.f32 0.0, %v527
      %529 = vmatmul.bf16.gmra.mxu0 %v360
      %v530 = vpop.f32.mrf.mxu0
      %v531 = vadd.f32 0.0, %v530
      %v532 = vpop.f32.mrf.mxu0
      %v533 = vadd.f32 0.0, %v532
      %534 = vmatmul.bf16.gmra.mxu0 %v363
      %v535 = vpop.f32.mrf.mxu0
      %v536 = vadd.f32 0.0, %v535
      %v537 = vpop.f32.mrf.mxu0
      %v538 = vadd.f32 0.0, %v537
      %539 = vmatmul.bf16.gmra.mxu0 %v366
      %v540 = vpop.f32.mrf.mxu0
      %v541 = vadd.f32 0.0, %v540
      %v542 = vpop.f32.mrf.mxu0
      %v543 = vadd.f32 0.0, %v542
      %544 = vmatmul.bf16.gmra.mxu0 %v369
      %v545 = vpop.f32.mrf.mxu0
      %v546 = vadd.f32 0.0, %v545
      %v547 = vpop.f32.mrf.mxu0
      %v548 = vadd.f32 0.0, %v547
      %549 = vmatmul.bf16.gmra.mxu0 %v372
      %v550 = vpop.f32.mrf.mxu0
      %v551 = vadd.f32 0.0, %v550
      %v552 = vpop.f32.mrf.mxu0
      %v553 = vadd.f32 0.0, %v552
      %554 = vmatmul.bf16.gmra.mxu0 %v375
      %v555 = vpop.f32.mrf.mxu0
      %v556 = vadd.f32 0.0, %v555
      %v557 = vpop.f32.mrf.mxu0
      %v558 = vadd.f32 0.0, %v557
      %559 = vmatmul.bf16.gmra.mxu0 %v378
      %v560 = vpop.f32.mrf.mxu0
      %v561 = vadd.f32 0.0, %v560
      %v562 = vpop.f32.mrf.mxu0
      %v563 = vadd.f32 0.0, %v562
      %564 = vdwg.mxu0
      %v565 = vmax.f32 %v397, %v402
      %v566 = vmax.f32 %v399, %v404
      %v567 = vmax.f32 %v565, %v407
      %v568 = vmax.f32 %v566, %v409
      %v569 = vmax.f32 %v567, %v412
      %v570 = vmax.f32 %v568, %v414
      %v571 = vmax.f32 %v569, %v417
      %v572 = vmax.f32 %v570, %v419
      %v573 = vmax.f32 %v571, %v422
      %v574 = vmax.f32 %v572, %v424
      %v575 = vmax.f32 %v573, %v427
      %v576 = vmax.f32 %v574, %v429
      %v577 = vmax.f32 %v575, %v432
      %v578 = vmax.f32 %v576, %v434
      %v579 = vmax.f32 %v577, %v437
      %v580 = vmax.f32 %v578, %v439
      %v581 = vmax.f32 %v579, %v442
      %v582 = vmax.f32 %v580, %v444
      %v583 = vmax.f32 %v581, %v447
      %v584 = vmax.f32 %v582, %v449
      %v585 = vmax.f32 %v583, %v452
      %v586 = vmax.f32 %v584, %v454
      %v587 = vmax.f32 %v585, %v457
      %v588 = vmax.f32 %v586, %v459
      %v589 = vmax.f32 %v587, %v462
      %v590 = vmax.f32 %v588, %v464
      %v591 = vmax.f32 %v589, %v467
      %v592 = vmax.f32 %v590, %v469
      %v593 = vmax.f32 %v591, %v472
      %v594 = vmax.f32 %v592, %v474
      %v595 = vmax.f32 %v593, %v594
      %v596 = vrot.slane %v595, 4
      %v597 = vmax.f32 %v595, %v596
      %v598 = vrot.slane %v597, 2
      %v599 = vmax.f32 %v597, %v598
      %v600 = vrot.slane %v599, 1
      %v601 = vmax.f32 %v599, %v600
      %v602 = vmax.f32 %v486, %v491
      %v603 = vmax.f32 %v488, %v493
      %v604 = vmax.f32 %v602, %v496
      %v605 = vmax.f32 %v603, %v498
      %v606 = vmax.f32 %v604, %v501
      %v607 = vmax.f32 %v605, %v503
      %v608 = vmax.f32 %v606, %v506
      %v609 = vmax.f32 %v607, %v508
      %v610 = vmax.f32 %v608, %v511
      %v611 = vmax.f32 %v609, %v513
      %v612 = vmax.f32 %v610, %v516
      %v613 = vmax.f32 %v611, %v518
      %v614 = vmax.f32 %v612, %v521
      %v615 = vmax.f32 %v613, %v523
      %v616 = vmax.f32 %v614, %v526
      %v617 = vmax.f32 %v615, %v528
      %v618 = vmax.f32 %v616, %v531
      %v619 = vmax.f32 %v617, %v533
      %v620 = vmax.f32 %v618, %v536
      %v621 = vmax.f32 %v619, %v538
      %v622 = vmax.f32 %v620, %v541
      %v623 = vmax.f32 %v621, %v543
      %v624 = vmax.f32 %v622, %v546
      %v625 = vmax.f32 %v623, %v548
      %v626 = vmax.f32 %v624, %v551
      %v627 = vmax.f32 %v625, %v553
      %v628 = vmax.f32 %v626, %v556
      %v629 = vmax.f32 %v627, %v558
      %v630 = vmax.f32 %v628, %v561
      %v631 = vmax.f32 %v629, %v563
      %v632 = vmax.f32 %v630, %v631
      %v633 = vrot.slane %v632, 4
      %v634 = vmax.f32 %v632, %v633
      %v635 = vrot.slane %v634, 2
      %v636 = vmax.f32 %v634, %v635
      %v637 = vrot.slane %v636, 1
      %v638 = vmax.f32 %v636, %v637
      %v639 = vsub.f32 %v397, %v601
      %v640 = vsub.f32 %v486, %v638
      %v641 = vsub.f32 %v399, %v601
      %v642 = vsub.f32 %v488, %v638
      %v643 = vsub.f32 %v402, %v601
      %v644 = vsub.f32 %v491, %v638
      %v645 = vsub.f32 %v404, %v601
      %v646 = vsub.f32 %v493, %v638
      %v647 = vsub.f32 %v407, %v601
      %v648 = vsub.f32 %v496, %v638
      %v649 = vsub.f32 %v409, %v601
      %v650 = vsub.f32 %v498, %v638
      %v651 = vsub.f32 %v412, %v601
      %v652 = vsub.f32 %v501, %v638
      %v653 = vsub.f32 %v414, %v601
      %v654 = vsub.f32 %v503, %v638
      %v655 = vsub.f32 %v417, %v601
      %v656 = vsub.f32 %v506, %v638
      %v657 = vsub.f32 %v419, %v601
      %v658 = vsub.f32 %v508, %v638
      %v659 = vsub.f32 %v422, %v601
      %v660 = vsub.f32 %v511, %v638
      %v661 = vsub.f32 %v424, %v601
      %v662 = vsub.f32 %v513, %v638
      %v663 = vsub.f32 %v427, %v601
      %v664 = vsub.f32 %v516, %v638
      %v665 = vsub.f32 %v429, %v601
      %v666 = vsub.f32 %v518, %v638
      %v667 = vsub.f32 %v432, %v601
      %v668 = vsub.f32 %v521, %v638
      %v669 = vsub.f32 %v434, %v601
      %v670 = vsub.f32 %v523, %v638
      %v671 = vsub.f32 %v437, %v601
      %v672 = vsub.f32 %v526, %v638
      %v673 = vsub.f32 %v439, %v601
      %v674 = vsub.f32 %v528, %v638
      %v675 = vsub.f32 %v442, %v601
      %v676 = vsub.f32 %v531, %v638
      %v677 = vsub.f32 %v444, %v601
      %v678 = vsub.f32 %v533, %v638
      %v679 = vsub.f32 %v447, %v601
      %v680 = vsub.f32 %v536, %v638
      %v681 = vsub.f32 %v449, %v601
      %v682 = vsub.f32 %v538, %v638
      %v683 = vsub.f32 %v452, %v601
      %v684 = vsub.f32 %v541, %v638
      %v685 = vsub.f32 %v454, %v601
      %v686 = vsub.f32 %v543, %v638
      %v687 = vsub.f32 %v457, %v601
      %v688 = vsub.f32 %v546, %v638
      %v689 = vsub.f32 %v459, %v601
      %v690 = vsub.f32 %v548, %v638
      %v691 = vsub.f32 %v462, %v601
      %v692 = vsub.f32 %v551, %v638
      %v693 = vsub.f32 %v464, %v601
      %v694 = vsub.f32 %v553, %v638
      %v695 = vsub.f32 %v467, %v601
      %v696 = vsub.f32 %v556, %v638
      %v697 = vsub.f32 %v469, %v601
      %v698 = vsub.f32 %v558, %v638
      %v699 = vsub.f32 %v472, %v601
      %v700 = vsub.f32 %v561, %v638
      %v701 = vsub.f32 %v474, %v601
      %v702 = vsub.f32 %v563, %v638
      %v703 = vmul.f32 %v639, 1.442695
      %v704 = vpow.pop %v703
      %v705 = vmul.f32 %v640, 1.442695
      %v706 = vpow.pop %v705
      %v707 = vmul.f32 %v641, 1.442695
      %v708 = vpow.pop %v707
      %v709 = vmul.f32 %v642, 1.442695
      %v710 = vpow.pop %v709
      %v711 = vmul.f32 %v643, 1.442695
      %v712 = vpow.pop %v711
      %v713 = vmul.f32 %v644, 1.442695
      %v714 = vpow.pop %v713
      %v715 = vmul.f32 %v645, 1.442695
      %v716 = vpow.pop %v715
      %v717 = vmul.f32 %v646, 1.442695
      %v718 = vpow.pop %v717
      %v719 = vmul.f32 %v647, 1.442695
      %v720 = vpow.pop %v719
      %v721 = vmul.f32 %v648, 1.442695
      %v722 = vpow.pop %v721
      %v723 = vmul.f32 %v649, 1.442695
      %v724 = vpow.pop %v723
      %v725 = vmul.f32 %v650, 1.442695
      %v726 = vpow.pop %v725
      %v727 = vmul.f32 %v651, 1.442695
      %v728 = vpow.pop %v727
      %v729 = vmul.f32 %v652, 1.442695
      %v730 = vpow.pop %v729
      %v731 = vmul.f32 %v653, 1.442695
      %v732 = vpow.pop %v731
      %v733 = vmul.f32 %v654, 1.442695
      %v734 = vpow.pop %v733
      %v735 = vmul.f32 %v655, 1.442695
      %v736 = vpow.pop %v735
      %v737 = vmul.f32 %v656, 1.442695
      %v738 = vpow.pop %v737
      %v739 = vmul.f32 %v657, 1.442695
      %v740 = vpow.pop %v739
      %v741 = vmul.f32 %v658, 1.442695
      %v742 = vpow.pop %v741
      %v743 = vmul.f32 %v659, 1.442695
      %v744 = vpow.pop %v743
      %v745 = vmul.f32 %v660, 1.442695
      %v746 = vpow.pop %v745
      %v747 = vmul.f32 %v661, 1.442695
      %v748 = vpow.pop %v747
      %v749 = vmul.f32 %v662, 1.442695
      %v750 = vpow.pop %v749
      %v751 = vmul.f32 %v663, 1.442695
      %v752 = vpow.pop %v751
      %v753 = vmul.f32 %v664, 1.442695
      %v754 = vpow.pop %v753
      %v755 = vmul.f32 %v665, 1.442695
      %v756 = vpow.pop %v755
      %v757 = vmul.f32 %v666, 1.442695
      %v758 = vpow.pop %v757
      %v759 = vmul.f32 %v667, 1.442695
      %v760 = vpow.pop %v759
      %v761 = vmul.f32 %v668, 1.442695
      %v762 = vpow.pop %v761
      %v763 = vmul.f32 %v669, 1.442695
      %v764 = vpow.pop %v763
      %v765 = vmul.f32 %v670, 1.442695
      %v766 = vpow.pop %v765
      %v767 = vmul.f32 %v671, 1.442695
      %v768 = vpow.pop %v767
      %v769 = vmul.f32 %v672, 1.442695
      %v770 = vpow.pop %v769
      %v771 = vmul.f32 %v673, 1.442695
      %v772 = vpow.pop %v771
      %v773 = vmul.f32 %v674, 1.442695
      %v774 = vpow.pop %v773
      %v775 = vmul.f32 %v675, 1.442695
      %v776 = vpow.pop %v775
      %v777 = vmul.f32 %v676, 1.442695
      %v778 = vpow.pop %v777
      %v779 = vmul.f32 %v677, 1.442695
      %v780 = vpow.pop %v779
      %v781 = vmul.f32 %v678, 1.442695
      %v782 = vpow.pop %v781
      %v783 = vmul.f32 %v679, 1.442695
      %v784 = vpow.pop %v783
      %v785 = vmul.f32 %v680, 1.442695
      %v786 = vpow.pop %v785
      %v787 = vmul.f32 %v681, 1.442695
      %v788 = vpow.pop %v787
      %v789 = vmul.f32 %v682, 1.442695
      %v790 = vpow.pop %v789
      %v791 = vmul.f32 %v683, 1.442695
      %v792 = vpow.pop %v791
      %v793 = vmul.f32 %v684, 1.442695
      %v794 = vpow.pop %v793
      %v795 = vmul.f32 %v685, 1.442695
      %v796 = vpow.pop %v795
      %v797 = vmul.f32 %v686, 1.442695
      %v798 = vpow.pop %v797
      %v799 = vmul.f32 %v687, 1.442695
      %v800 = vpow.pop %v799
      %v801 = vmul.f32 %v688, 1.442695
      %v802 = vpow.pop %v801
      %v803 = vmul.f32 %v689, 1.442695
      %v804 = vpow.pop %v803
      %v805 = vmul.f32 %v690, 1.442695
      %v806 = vpow.pop %v805
      %v807 = vmul.f32 %v691, 1.442695
      %v808 = vpow.pop %v807
      %v809 = vmul.f32 %v692, 1.442695
      %v810 = vpow.pop %v809
      %v811 = vmul.f32 %v693, 1.442695
      %v812 = vpow.pop %v811
      %v813 = vmul.f32 %v694, 1.442695
      %v814 = vpow.pop %v813
      %v815 = vmul.f32 %v695, 1.442695
      %v816 = vpow.pop %v815
      %v817 = vmul.f32 %v696, 1.442695
      %v818 = vpow.pop %v817
      %v819 = vmul.f32 %v697, 1.442695
      %v820 = vpow.pop %v819
      %v821 = vmul.f32 %v698, 1.442695
      %v822 = vpow.pop %v821
      %v823 = vmul.f32 %v699, 1.442695
      %v824 = vpow.pop %v823
      %v825 = vmul.f32 %v700, 1.442695
      %v826 = vpow.pop %v825
      %v827 = vmul.f32 %v701, 1.442695
      %v828 = vpow.pop %v827
      %v829 = vmul.f32 %v702, 1.442695
      %v830 = vpow.pop %v829
      %v831 = vadd.f32 %v704, %v708
      %v832 = vadd.f32 %v831, %v712
      %v833 = vadd.f32 %v832, %v716
      %v834 = vadd.f32 %v833, %v720
      %v835 = vadd.f32 %v834, %v724
      %v836 = vadd.f32 %v835, %v728
      %v837 = vadd.f32 %v836, %v732
      %v838 = vadd.f32 %v837, %v736
      %v839 = vadd.f32 %v838, %v740
      %v840 = vadd.f32 %v839, %v744
      %v841 = vadd.f32 %v840, %v748
      %v842 = vadd.f32 %v841, %v752
      %v843 = vadd.f32 %v842, %v756
      %v844 = vadd.f32 %v843, %v760
      %v845 = vadd.f32 %v844, %v764
      %v846 = vadd.f32 %v845, %v768
      %v847 = vadd.f32 %v846, %v772
      %v848 = vadd.f32 %v847, %v776
      %v849 = vadd.f32 %v848, %v780
      %v850 = vadd.f32 %v849, %v784
      %v851 = vadd.f32 %v850, %v788
      %v852 = vadd.f32 %v851, %v792
      %v853 = vadd.f32 %v852, %v796
      %v854 = vadd.f32 %v853, %v800
      %v855 = vadd.f32 %v854, %v804
      %v856 = vadd.f32 %v855, %v808
      %v857 = vadd.f32 %v856, %v812
      %v858 = vadd.f32 %v857, %v816
      %v859 = vadd.f32 %v858, %v820
      %v860 = vadd.f32 %v859, %v824
      %v861 = vadd.f32 %v860, %v828
      %v862 = vrot.slane %v861, 4
      %v863 = vadd.f32 %v861, %v862
      %v864 = vrot.slane %v863, 2
      %v865 = vadd.f32 %v863, %v864
      %v866 = vrot.slane %v865, 1
      %v867 = vadd.f32 %v865, %v866
      %v868 = vadd.f32 %v706, %v710
      %v869 = vadd.f32 %v868, %v714
      %v870 = vadd.f32 %v869, %v718
      %v871 = vadd.f32 %v870, %v722
      %v872 = vadd.f32 %v871, %v726
      %v873 = vadd.f32 %v872, %v730
      %v874 = vadd.f32 %v873, %v734
      %v875 = vadd.f32 %v874, %v738
      %v876 = vadd.f32 %v875, %v742
      %v877 = vadd.f32 %v876, %v746
      %v878 = vadd.f32 %v877, %v750
      %v879 = vadd.f32 %v878, %v754
      %v880 = vadd.f32 %v879, %v758
      %v881 = vadd.f32 %v880, %v762
      %v882 = vadd.f32 %v881, %v766
      %v883 = vadd.f32 %v882, %v770
      %v884 = vadd.f32 %v883, %v774
      %v885 = vadd.f32 %v884, %v778
      %v886 = vadd.f32 %v885, %v782
      %v887 = vadd.f32 %v886, %v786
      %v888 = vadd.f32 %v887, %v790
      %v889 = vadd.f32 %v888, %v794
      %v890 = vadd.f32 %v889, %v798
      %v891 = vadd.f32 %v890, %v802
      %v892 = vadd.f32 %v891, %v806
      %v893 = vadd.f32 %v892, %v810
      %v894 = vadd.f32 %v893, %v814
      %v895 = vadd.f32 %v894, %v818
      %v896 = vadd.f32 %v895, %v822
      %v897 = vadd.f32 %v896, %v826
      %v898 = vadd.f32 %v897, %v830
      %v899 = vrot.slane %v898, 4
      %v900 = vadd.f32 %v898, %v899
      %v901 = vrot.slane %v900, 2
      %v902 = vadd.f32 %v900, %v901
      %v903 = vrot.slane %v902, 1
      %v904 = vadd.f32 %v902, %v903
      %v905 = vpack.c.bf16 %v708, %v704
      %v906 = vpack.c.bf16 %v710, %v706
      %v907 = vpack.c.bf16 %v716, %v712
      %v908 = vpack.c.bf16 %v718, %v714
      %v909 = vpack.c.bf16 %v724, %v720
      %v910 = vpack.c.bf16 %v726, %v722
      %v911 = vpack.c.bf16 %v732, %v728
      %v912 = vpack.c.bf16 %v734, %v730
      %v913 = vpack.c.bf16 %v740, %v736
      %v914 = vpack.c.bf16 %v742, %v738
      %v915 = vpack.c.bf16 %v748, %v744
      %v916 = vpack.c.bf16 %v750, %v746
      %v917 = vpack.c.bf16 %v756, %v752
      %v918 = vpack.c.bf16 %v758, %v754
      %v919 = vpack.c.bf16 %v764, %v760
      %v920 = vpack.c.bf16 %v766, %v762
      %v921 = vpack.c.bf16 %v772, %v768
      %v922 = vpack.c.bf16 %v774, %v770
      %v923 = vpack.c.bf16 %v780, %v776
      %v924 = vpack.c.bf16 %v782, %v778
      %v925 = vpack.c.bf16 %v788, %v784
      %v926 = vpack.c.bf16 %v790, %v786
      %v927 = vpack.c.bf16 %v796, %v792
      %v928 = vpack.c.bf16 %v798, %v794
      %v929 = vpack.c.bf16 %v804, %v800
      %v930 = vpack.c.bf16 %v806, %v802
      %v931 = vpack.c.bf16 %v812, %v808
      %v932 = vpack.c.bf16 %v814, %v810
      %v933 = vpack.c.bf16 %v820, %v816
      %v934 = vpack.c.bf16 %v822, %v818
      %v935 = vpack.c.bf16 %v828, %v824
      %v936 = vpack.c.bf16 %v830, %v826
      %937 = vmatpush.bf16.msra.mxu0 %v919
      %938 = vmatpush.bf16.msra.mxu0 %v917
      %939 = vmatpush.bf16.msra.mxu0 %v915
      %940 = vmatpush.bf16.msra.mxu0 %v913
      %941 = vmatpush.bf16.msra.mxu0 %v911
      %942 = vmatpush.bf16.msra.mxu0 %v909
      %943 = vmatpush.bf16.msra.mxu0 %v907
      %944 = vmatpush.bf16.msra.mxu0 %v905
      %945 = vmatmul.bf16.gmra.mxu0 %v297
      %v946 = vpop.f32.mrf.mxu0
      %v947 = vadd.f32 0.0, %v946
      %v948 = vpop.f32.mrf.mxu0
      %v949 = vadd.f32 0.0, %v948
      %950 = vmatmul.bf16.gmra.mxu0 %v299
      %v951 = vpop.f32.mrf.mxu0
      %v952 = vadd.f32 0.0, %v951
      %v953 = vpop.f32.mrf.mxu0
      %v954 = vadd.f32 0.0, %v953
      %955 = vdwg.mxu0
      %956 = vmatpush.bf16.msra.mxu0 %v935
      %957 = vmatpush.bf16.msra.mxu0 %v933
      %958 = vmatpush.bf16.msra.mxu0 %v931
      %959 = vmatpush.bf16.msra.mxu0 %v929
      %960 = vmatpush.bf16.msra.mxu0 %v927
      %961 = vmatpush.bf16.msra.mxu0 %v925
      %962 = vmatpush.bf16.msra.mxu0 %v923
      %963 = vmatpush.bf16.msra.mxu0 %v921
      %964 = vmatmul.bf16.gmra.mxu0 %v298
      %v965 = vpop.f32.mrf.mxu0
      %v966 = vadd.f32 %v947, %v965
      %v967 = vpop.f32.mrf.mxu0
      %v968 = vadd.f32 %v949, %v967
      %969 = vmatmul.bf16.gmra.mxu0 %v300
      %v970 = vpop.f32.mrf.mxu0
      %v971 = vadd.f32 %v952, %v970
      %v972 = vpop.f32.mrf.mxu0
      %v973 = vadd.f32 %v954, %v972
      %974 = vdwg.mxu0
      %975 = vmatpush.bf16.msra.mxu0 %v920
      %976 = vmatpush.bf16.msra.mxu0 %v918
      %977 = vmatpush.bf16.msra.mxu0 %v916
      %978 = vmatpush.bf16.msra.mxu0 %v914
      %979 = vmatpush.bf16.msra.mxu0 %v912
      %980 = vmatpush.bf16.msra.mxu0 %v910
      %981 = vmatpush.bf16.msra.mxu0 %v908
      %982 = vmatpush.bf16.msra.mxu0 %v906
      %983 = vmatmul.bf16.gmra.mxu0 %v297
      %v984 = vpop.f32.mrf.mxu0
      %v985 = vadd.f32 0.0, %v984
      %v986 = vpop.f32.mrf.mxu0
      %v987 = vadd.f32 0.0, %v986
      %988 = vmatmul.bf16.gmra.mxu0 %v299
      %v989 = vpop.f32.mrf.mxu0
      %v990 = vadd.f32 0.0, %v989
      %v991 = vpop.f32.mrf.mxu0
      %v992 = vadd.f32 0.0, %v991
      %993 = vdwg.mxu0
      %994 = vmatpush.bf16.msra.mxu0 %v936
      %995 = vmatpush.bf16.msra.mxu0 %v934
      %996 = vmatpush.bf16.msra.mxu0 %v932
      %997 = vmatpush.bf16.msra.mxu0 %v930
      %998 = vmatpush.bf16.msra.mxu0 %v928
      %999 = vmatpush.bf16.msra.mxu0 %v926
      %1000 = vmatpush.bf16.msra.mxu0 %v924
      %1001 = vmatpush.bf16.msra.mxu0 %v922
      %1002 = vmatmul.bf16.gmra.mxu0 %v298
      %v1003 = vpop.f32.mrf.mxu0
      %v1004 = vadd.f32 %v985, %v1003
      %v1005 = vpop.f32.mrf.mxu0
      %v1006 = vadd.f32 %v987, %v1005
      %1007 = vmatmul.bf16.gmra.mxu0 %v300
      %v1008 = vpop.f32.mrf.mxu0
      %v1009 = vadd.f32 %v990, %v1008
      %v1010 = vpop.f32.mrf.mxu0
      %v1011 = vadd.f32 %v992, %v1010
      %1012 = vdwg.mxu0
      %v1013 = vrcp.pop %v867
      %v1014 = vrcp.pop %v904
      %v1015 = vmul.f32 %v966, %v1013
      %v1016 = vmul.f32 %v1004, %v1014
      %v1017 = vmul.f32 %v968, %v1013
      %v1018 = vmul.f32 %v1006, %v1014
      %v1019 = vmul.f32 %v971, %v1013
      %v1020 = vmul.f32 %v1009, %v1014
      %v1021 = vmul.f32 %v973, %v1013
      %v1022 = vmul.f32 %v1011, %v1014
      %1023 = vset.pattern.permute.xlu0 1
      %1024 = vperm.xlu0 %1023, %v177
      %v1025 = vpop.permute.xlu0 %1024
      %1027 = vset.pattern.permute.xlu0 1
      %1028 = vperm.xlu0 %1027, %v178
      %v1029 = vpop.permute.xlu0 %1028
      %1031 = vset.pattern.permute.xlu0 1
      %1032 = vperm.xlu0 %1031, %v179
      %v1033 = vpop.permute.xlu0 %1032
      %1035 = vset.pattern.permute.xlu0 1
      %1036 = vperm.xlu0 %1035, %v180
      %v1037 = vpop.permute.xlu0 %1036
      %v1039 = vmul.f32 %v1025, %v1015
      %v1040 = vmul.f32 %v1025, %v1016
      %v1041 = vmul.f32 %v1029, %v1017
      %v1042 = vmul.f32 %v1029, %v1018
      %v1043 = vmul.f32 %v1033, %v1019
      %v1044 = vmul.f32 %v1033, %v1020
      %v1045 = vmul.f32 %v1037, %v1021
      %v1046 = vmul.f32 %v1037, %v1022
      %v1047 = vadd.f32 %v1039, %v182
      %v1048 = vadd.f32 %v1040, %v183
      %v1049 = vadd.f32 %v1041, %v184
      %v1050 = vadd.f32 %v1042, %v185
      %v1051 = vadd.f32 %v1043, %v186
      %v1052 = vadd.f32 %v1044, %v187
      %v1053 = vadd.f32 %v1045, %v188
      %v1054 = vadd.f32 %v1046, %v189
      %1055 = vst [vmem:[%s170] sm:$0xff] %v1047
      %1056 = vst [vmem:[%s170 + $0x8] sm:$0xff] %v1048
      %1057 = vst [vmem:[%s170 + $0x10] sm:$0xff] %v1049
      %1058 = vst [vmem:[%s170 + $0x18] sm:$0xff] %v1050
      %1059 = vst [vmem:[%s170 + $0x20] sm:$0xff] %v1051
      %1060 = vst [vmem:[%s170 + $0x28] sm:$0xff] %v1052
      %1061 = vst [vmem:[%s170 + $0x30] sm:$0xff] %v1053
      %1062 = vst [vmem:[%s170 + $0x38] sm:$0xff] %v1054
      %p1063 = scmp.lt.s32.totalorder %s14, 1
      %s1064 = scalar_select %p1063, %s14, 1
      %s1065 = smul.addr %s1064, 8
      %s1066 = smul.addr %s1065, 8
      %s1067 = scalar_lea.vmem %s3, %s1066
      // Predicated region
      $region33: #{self_attention.1} parent=31 // pred_check
        %p1068 = pneg %p100
      $region34: #{self_attention.1} parent=31 // pred_check_branch
        %1070 = sbr.rel (%p1068) target = $region36
      $region35: #{self_attention.1} parent=31 // pred_region
        _
      $region36: #{self_attention.1} parent=31 // pred_fallthru
        _
    $region32: #{self_attention.1} parent=5 // pred_fallthru
      _
    %p1071 = scmp.le.s32.totalorder 2, %s9
    // Predicated region
    $region37: #{self_attention.1} parent=5 // pred_check
      %p1072 = pneg %p1071
    $region38: #{self_attention.1} parent=5 // pred_check_branch
      %1074 = sbr.rel (%p1072) target = $region40
    $region39: #{self_attention.1} parent=5 // pred_region
      %s1075 = ssub.s32 %s9, 2
      // Predicated region
      $region41: #{self_attention.1} parent=39 // pred_check
        %p1076 = pneg %p106
      $region42: #{self_attention.1} parent=39 // pred_check_branch
        %1078 = sbr.rel (%p1076) target = $region44
      $region43: #{self_attention.1} parent=39 // pred_region
        %p1079 = scmp.lt.s32.totalorder %s15, 1
        %s1080 = scalar_select %p1079, %s15, 1
        %s1081 = smul.addr %s1080, 8
        %s1082 = smul.addr %s1081, 8
        %s1083 = scalar_lea.vmem %s3, %s1082
      $region44: #{self_attention.1} parent=39 // pred_fallthru
        _
    $region40: #{self_attention.1} parent=5 // pred_fallthru
      _
  $region6: #{self_attention.1} parent=0 // loop_footer
    %s13 = sadd.s32 1, %s9
  $region7: #{self_attention.1} parent=0 // loop_footer_branch
    %8 = sbr.rel target = $region3
  $region8: #{self_attention.1} parent=0 // loop_exit
    _

</llo_original>
